<compile_context>
chip_gen: v7x
topology: tpu7x:2x2x1
jax: 0.10.0
libtpu: 0.0.40
codegen_flags: <defaults>
</compile_context>

<pallas_src>
import functools

import jax
import jax.numpy as jnp
from jax.experimental import pallas as pl
from jax.experimental.pallas import tpu as pltpu


def _round_up(n, m):
    return (n + m - 1) // m * m


def _cdiv(a, b):
    return -(-a // b)


def _attention_gate_kernel(x_ref, g_ref, wx_ref, wg_ref, b_ref, wpsi_ref,
                           out_ref, *, f_l):
    """One (batch, pixel-tile) grid step, NCHW-native layout.

    x_ref   : (1, F_lp, TM)  skip connection; channels on sublanes, pixels on lanes
    g_ref   : (1, F_gp, TM)  gating signal
    wx_ref  : (F_ip, F_lp)   BN-folded W_x^T  (f32)
    wg_ref  : (F_ip, F_gp)   BN-folded W_g^T  (f32)
    b_ref   : (F_ip, 1)      merged W_x/W_g bias + BN shift (f32)
    wpsi_ref: (8, F_ip)      row 0 = BN-folded psi weights, [1,0] = psi bias (f32)
    out_ref : (1, F_l, TM)
    """
    x = x_ref[0]                                     # (F_lp, TM)
    g = g_ref[0]                                     # (F_gp, TM)

    # Both 1x1 convolutions as channel-contracting MXU matmuls, f32 accumulate.
    x1 = jnp.dot(wx_ref[...], x, preferred_element_type=jnp.float32)
    g1 = jnp.dot(wg_ref[...], g, preferred_element_type=jnp.float32)
    a = jnp.maximum(x1 + g1 + b_ref[...], 0.0)       # ReLU(g1 + x1), (F_ip, TM)

    # psi projection as a second (tiny-M) MXU dot -> lane-dense (1, TM) row.
    pp = jnp.dot(wpsi_ref[...], a, preferred_element_type=jnp.float32)  # (8, TM)
    psi = jax.nn.sigmoid(pp[0:1, :] + wpsi_ref[1:2, 0:1])               # (1, TM)

    # Gate the skip connection; drop channel padding rows (if any) on the write.
    xg = x if f_l == x.shape[0] else x[:f_l, :]
    out_ref[0] = (xg * psi).astype(out_ref.dtype)


def _fold_bn(conv_bias, gamma, beta, mean, var, eps=1e-5):
    """Fold conv bias + inference BatchNorm into y = z*scale + shift."""
    inv = gamma / jnp.sqrt(var + eps)
    shift = (conv_bias - mean) * inv + beta
    return inv.astype(jnp.float32), shift.astype(jnp.float32)


def attention_block(g, x, params, *, eps=1e-5, max_tile=8192):
    """g, x: NCHW arrays. Returns x * psi (NCHW)."""
    N, F_g, H, W = g.shape
    _, F_l, _, _ = x.shape
    F_int = params["wg"].shape[1]
    HW = H * W
    cdtype = x.dtype
    itemsize = jnp.dtype(cdtype).itemsize

    # Channel padding only to the 8-sublane granularity, and only when the real
    # channel count is misaligned (never for typical UNet widths).
    F_lp = _round_up(F_l, 8)
    F_gp = _round_up(F_g, 8)
    F_ip = _round_up(F_int, 8)

    # NCHW-native: reshape (metadata-only, no transpose / no HBM slab).
    x3 = x.reshape(N, F_l, HW)
    g3 = g.reshape(N, F_g, HW)
    if F_lp != F_l:
        x3 = jnp.pad(x3, ((0, 0), (0, F_lp - F_l), (0, 0)))
    if F_gp != F_g:
        g3 = jnp.pad(g3, ((0, 0), (0, F_gp - F_g), (0, 0)))

    # Fold conv bias + inference BatchNorm into the weights / one bias column.
    sg, tg = _fold_bn(params["bg"], params["g_gamma"], params["g_beta"],
                      params["g_mean"], params["g_var"], eps)
    sx, tx = _fold_bn(params["bx"], params["x_gamma"], params["x_beta"],
                      params["x_mean"], params["x_var"], eps)
    sp, tp = _fold_bn(params["bpsi"], params["p_gamma"], params["p_beta"],
                      params["p_mean"], params["p_var"], eps)

    wx_t = jnp.zeros((F_ip, F_lp), jnp.float32)
    wx_t = wx_t.at[:F_int, :F_l].set((params["wx"].astype(jnp.float32) * sx[None, :]).T)
    wg_t = jnp.zeros((F_ip, F_gp), jnp.float32)
    wg_t = wg_t.at[:F_int, :F_g].set((params["wg"].astype(jnp.float32) * sg[None, :]).T)
    bcol = jnp.zeros((F_ip, 1), jnp.float32).at[:F_int, 0].set(tg + tx)
    wpsi_c = jnp.zeros((8, F_ip), jnp.float32)
    wpsi_c = wpsi_c.at[0, :F_int].set(params["wpsi"][:, 0].astype(jnp.float32) * sp)
    wpsi_c = wpsi_c.at[1, 0].set(tp[0])              # BN-folded psi bias

    # Generation-aware VMEM budget (128 MiB on v5e/v6e, 64 MiB on v7x).
    try:
        vmem_cap = int(pltpu.get_tpu_info().vmem_capacity_bytes)
    except Exception:
        vmem_cap = 64 * 1024 * 1024                   # conservative (v7x-sized)
    vmem_limit = min((vmem_cap * 3) // 4, 96 * 1024 * 1024)
    tile_budget = int(vmem_limit * 0.8)

    # Bytes per pixel lane of a tile: double-buffered x/g inputs + output, plus
    # single-buffered f32 intermediates (x1, g1, a, promotions, gated product).
    per_lane = (2 * (F_lp + F_gp + F_l) * itemsize
                + (4 * F_ip + F_lp + F_gp + F_l) * 4)

    if HW <= 128:
        tm = HW                                       # full-dim (tiny) block
    else:
        tm = min(max_tile,
                 (HW // 128) * 128,
                 max(128, (tile_budget // per_lane) // 128 * 128))
        # v7x has two TensorCores sharing the "parallel" grid: keep >= 4 steps.
        while N * _cdiv(HW, tm) < 4 and tm > 128:
            tm = max(128, (tm // 2) // 128 * 128)
    n_tiles = _cdiv(HW, tm)
    grid = (N, n_tiles)

    m_total = N * HW
    cost = pl.CostEstimate(
        flops=2 * m_total * (F_ip * (F_lp + F_gp + 8) + F_l),
        transcendentals=2 * m_total,
        bytes_accessed=m_total * (F_lp + F_gp + F_l) * itemsize
                       + int(wx_t.size + wg_t.size + bcol.size + wpsi_c.size) * 4,
    )

    kernel = functools.partial(_attention_gate_kernel, f_l=F_l)

    out3 = pl.pallas_call(
        kernel,
        out_shape=jax.ShapeDtypeStruct((N, F_l, HW), cdtype),
        grid_spec=pltpu.PrefetchScalarGridSpec(
            num_scalar_prefetch=0,
            grid=grid,
            in_specs=[
                pl.BlockSpec((1, F_lp, tm), lambda n, i: (n, 0, i)),   # x tile
                pl.BlockSpec((1, F_gp, tm), lambda n, i: (n, 0, i)),   # g tile
                pl.BlockSpec((F_ip, F_lp), lambda n, i: (0, 0)),       # Wx^T
                pl.BlockSpec((F_ip, F_gp), lambda n, i: (0, 0)),       # Wg^T
                pl.BlockSpec((F_ip, 1), lambda n, i: (0, 0)),          # merged bias
                pl.BlockSpec((8, F_ip), lambda n, i: (0, 0)),          # psi w + bias
            ],
            out_specs=pl.BlockSpec((1, F_l, tm), lambda n, i: (n, 0, i)),
        ),
        compiler_params=pltpu.CompilerParams(
            dimension_semantics=("parallel", "parallel"),
            vmem_limit_bytes=vmem_limit,
        ),
        cost_estimate=cost,
    )(x3, g3, wx_t, wg_t, bcol, wpsi_c)

    # TODO(synk): optional bf16 streaming of the pixel tiles (halves HBM bytes on
    # v5e) is left out to keep f32 numerics identical to the PyTorch module.
    return out3.reshape(N, F_l, H, W)


def _reference(g, x, params, eps=1e-5):
    """Pure-JAX reference of the PyTorch forward (inference-mode BN)."""
    def conv1x1(inp, w, b):  # inp NCHW, w (Cin, Cout)
        y = jnp.einsum("nchw,cd->ndhw", inp, w)
        return y + b[None, :, None, None]

    def bn(y, gamma, beta, mean, var):
        inv = gamma / jnp.sqrt(var + eps)
        return (y - mean[None, :, None, None]) * inv[None, :, None, None] \
               + beta[None, :, None, None]

    g1 = bn(conv1x1(g, params["wg"], params["bg"]),
            params["g_gamma"], params["g_beta"], params["g_mean"], params["g_var"])
    x1 = bn(conv1x1(x, params["wx"], params["bx"]),
            params["x_gamma"], params["x_beta"], params["x_mean"], params["x_var"])
    a = jnp.maximum(g1 + x1, 0.0)
    p = bn(conv1x1(a, params["wpsi"], params["bpsi"]),
           params["p_gamma"], params["p_beta"], params["p_mean"], params["p_var"])
    psi = jax.nn.sigmoid(p)
    return x * psi


def make_params(key, F_g, F_l, F_int):
    ks = jax.random.split(key, 6)
    # Conv 1x1 weights stored as (Cin, Cout) (PyTorch is (Cout, Cin, 1, 1)).
    p = {
        "wg": jax.random.normal(ks[0], (F_g, F_int), jnp.float32) * 0.3,
        "bg": jax.random.normal(ks[1], (F_int,), jnp.float32) * 0.1,
        "wx": jax.random.normal(ks[2], (F_l, F_int), jnp.float32) * 0.3,
        "bx": jax.random.normal(ks[3], (F_int,), jnp.float32) * 0.1,
        "wpsi": jax.random.normal(ks[4], (F_int, 1), jnp.float32) * 0.3,
        "bpsi": jax.random.normal(ks[5], (1,), jnp.float32) * 0.1,
        # BatchNorm (inference) params / running stats — deterministic, non-trivial.
        "g_gamma": jnp.linspace(0.9, 1.1, F_int),
        "g_beta": jnp.linspace(-0.05, 0.05, F_int),
        "g_mean": jnp.linspace(-0.1, 0.1, F_int),
        "g_var": jnp.linspace(0.8, 1.2, F_int),
        "x_gamma": jnp.linspace(1.05, 0.95, F_int),
        "x_beta": jnp.linspace(0.02, -0.02, F_int),
        "x_mean": jnp.linspace(0.1, -0.1, F_int),
        "x_var": jnp.linspace(1.1, 0.9, F_int),
        "p_gamma": jnp.array([1.05], jnp.float32),
        "p_beta": jnp.array([0.01], jnp.float32),
        "p_mean": jnp.array([0.05], jnp.float32),
        "p_var": jnp.array([0.95], jnp.float32),
    }
    return {k: v.astype(jnp.float32) for k, v in p.items()}


if __name__ == "__main__":
    key = jax.random.PRNGKey(0)
    kg, kx, kp = jax.random.split(key, 3)

    N, F_g, F_l, F_int, H, W = 2, 4, 4, 8, 16, 16
    g = jax.random.normal(kg, (N, F_g, H, W), jnp.float32)
    x = jax.random.normal(kx, (N, F_l, H, W), jnp.float32)
    params = make_params(kp, F_g, F_l, F_int)

    out = attention_block(g, x, params)
    out = jax.block_until_ready(out)

    ref = _reference(g, x, params)
    assert out.shape == x.shape
    assert jnp.allclose(out, ref, atol=1e-5, rtol=1e-5), "mismatch vs reference"
    print("KERNEL_OK")
</pallas_src>

<mosaic_0001>
module attributes {stable_mosaic.version = 11 : i64} {
  func.func @_attention_gate_kernel(%arg0: i32, %arg1: i32, %arg2: memref<1x8x128xf32, #tpu.memory_space<vmem>>, %arg3: memref<1x8x128xf32, #tpu.memory_space<vmem>>, %arg4: memref<8x8xf32, #tpu.memory_space<vmem>>, %arg5: memref<8x8xf32, #tpu.memory_space<vmem>>, %arg6: memref<8x1xf32, #tpu.memory_space<vmem>>, %arg7: memref<8x8xf32, #tpu.memory_space<vmem>>, %arg8: memref<1x4x128xf32, #tpu.memory_space<vmem>>) attributes {dimension_semantics = [#tpu.dimension_semantics<parallel>, #tpu.dimension_semantics<parallel>], iteration_bounds = array<i64: 2, 2>, scalar_prefetch = 0 : i64, scratch_operands = 0 : i64, tpu.core_type = #tpu.core_type<tc>, window_params = [{transform_indices = @transform_0, window_bounds = array<i64: 1, 8, 128>}, {transform_indices = @transform_1, window_bounds = array<i64: 1, 8, 128>}, {pipeline_mode = #tpu.pipeline_mode<synchronous>, transform_indices = @transform_2, window_bounds = array<i64: 8, 8>}, {pipeline_mode = #tpu.pipeline_mode<synchronous>, transform_indices = @transform_3, window_bounds = array<i64: 8, 8>}, {pipeline_mode = #tpu.pipeline_mode<synchronous>, transform_indices = @transform_4, window_bounds = array<i64: 8, 1>}, {pipeline_mode = #tpu.pipeline_mode<synchronous>, transform_indices = @transform_5, window_bounds = array<i64: 8, 8>}, {transform_indices = @transform_6, window_bounds = array<i64: 1, 4, 128>}]} {
    %c0 = arith.constant 0 : index
    %c0_0 = arith.constant 0 : index
    %c0_1 = arith.constant 0 : index
    %0 = vector.load %arg2[%c0, %c0_0, %c0_1] : memref<1x8x128xf32, #tpu.memory_space<vmem>>, vector<1x8x128xf32>
    %1 = vector.shape_cast %0 : vector<1x8x128xf32> to vector<8x128xf32>
    %c0_2 = arith.constant 0 : index
    %c0_3 = arith.constant 0 : index
    %c0_4 = arith.constant 0 : index
    %2 = vector.load %arg3[%c0_2, %c0_3, %c0_4] : memref<1x8x128xf32, #tpu.memory_space<vmem>>, vector<1x8x128xf32>
    %3 = vector.shape_cast %2 : vector<1x8x128xf32> to vector<8x128xf32>
    %c0_5 = arith.constant 0 : index
    %c0_6 = arith.constant 0 : index
    %4 = vector.load %arg4[%c0_5, %c0_6] : memref<8x8xf32, #tpu.memory_space<vmem>>, vector<8x8xf32>
    %cst = arith.constant dense<0.000000e+00> : vector<8x128xf32>
    %5 = tpu.matmul %4, %1, %cst {dimension_numbers = #tpu.dot_dimension_numbers<[1], [0], [0], [1], [0, 0, 1, 1], [], []>} : vector<8x8xf32>, vector<8x128xf32>, vector<8x128xf32> -> vector<8x128xf32>
    %c0_7 = arith.constant 0 : index
    %c0_8 = arith.constant 0 : index
    %6 = vector.load %arg5[%c0_7, %c0_8] : memref<8x8xf32, #tpu.memory_space<vmem>>, vector<8x8xf32>
    %cst_9 = arith.constant dense<0.000000e+00> : vector<8x128xf32>
    %7 = tpu.matmul %6, %3, %cst_9 {dimension_numbers = #tpu.dot_dimension_numbers<[1], [0], [0], [1], [0, 0, 1, 1], [], []>} : vector<8x8xf32>, vector<8x128xf32>, vector<8x128xf32> -> vector<8x128xf32>
    %8 = arith.addf %5, %7 : vector<8x128xf32>
    %c0_10 = arith.constant 0 : index
    %c0_11 = arith.constant 0 : index
    %9 = vector.load %arg6[%c0_10, %c0_11] : memref<8x1xf32, #tpu.memory_space<vmem>>, vector<8x1xf32>
    %10 = vector.broadcast %9 : vector<8x1xf32> to vector<8x128xf32>
    %11 = arith.addf %8, %10 : vector<8x128xf32>
    %cst_12 = arith.constant 0.000000e+00 : f32
    %12 = vector.broadcast %cst_12 : f32 to vector<8x128xf32>
    %13 = arith.maximumf %11, %12 : vector<8x128xf32>
    %c0_13 = arith.constant 0 : index
    %c0_14 = arith.constant 0 : index
    %14 = vector.load %arg7[%c0_13, %c0_14] : memref<8x8xf32, #tpu.memory_space<vmem>>, vector<8x8xf32>
    %cst_15 = arith.constant dense<0.000000e+00> : vector<8x128xf32>
    %15 = tpu.matmul %14, %13, %cst_15 {dimension_numbers = #tpu.dot_dimension_numbers<[1], [0], [0], [1], [0, 0, 1, 1], [], []>} : vector<8x8xf32>, vector<8x128xf32>, vector<8x128xf32> -> vector<8x128xf32>
    %16 = vector.extract_strided_slice %15 {offsets = [0, 0], sizes = [1, 128], strides = [1, 1]} : vector<8x128xf32> to vector<1x128xf32>
    %c1 = arith.constant 1 : index
    %c0_16 = arith.constant 0 : index
    %17 = vector.load %arg7[%c1, %c0_16] : memref<8x8xf32, #tpu.memory_space<vmem>>, vector<1x1xf32>
    %18 = vector.broadcast %17 : vector<1x1xf32> to vector<1x128xf32>
    %19 = arith.addf %16, %18 : vector<1x128xf32>
    %20 = arith.negf %19 : vector<1x128xf32>
    %21 = math.exp %20 : vector<1x128xf32>
    %cst_17 = arith.constant 1.000000e+00 : f32
    %22 = vector.broadcast %cst_17 : f32 to vector<1x128xf32>
    %23 = arith.addf %22, %21 : vector<1x128xf32>
    %24 = arith.divf %22, %23 : vector<1x128xf32>
    %25 = vector.extract_strided_slice %1 {offsets = [0, 0], sizes = [4, 128], strides = [1, 1]} : vector<8x128xf32> to vector<4x128xf32>
    %26 = vector.broadcast %24 : vector<1x128xf32> to vector<4x128xf32>
    %27 = arith.mulf %25, %26 : vector<4x128xf32>
    %c0_18 = arith.constant 0 : index
    %c0_19 = arith.constant 0 : index
    %c0_20 = arith.constant 0 : index
    %28 = vector.load %arg8[%c0_18, %c0_19, %c0_20] : memref<1x4x128xf32, #tpu.memory_space<vmem>>, vector<1x4x128xf32>
    %29 = vector.shape_cast %28 : vector<1x4x128xf32> to vector<4x128xf32>
    %30 = vector.shape_cast %27 : vector<4x128xf32> to vector<1x4x128xf32>
    tpu.vector_store %arg8[%c0_18, %c0_19, %c0_20], %30 {strides = array<i32>} : memref<1x4x128xf32, #tpu.memory_space<vmem>>, vector<1x4x128xf32>,
    return
  }
  func.func @transform_0(%arg0: i32, %arg1: i32) -> (i32, i32, i32) {
    %c0_i32 = arith.constant 0 : i32
    %c0_i32_0 = arith.constant 0 : i32
    return %arg0, %c0_i32, %arg1 : i32, i32, i32
  }
  func.func @transform_1(%arg0: i32, %arg1: i32) -> (i32, i32, i32) {
    %c0_i32 = arith.constant 0 : i32
    %c0_i32_0 = arith.constant 0 : i32
    return %arg0, %c0_i32, %arg1 : i32, i32, i32
  }
  func.func @transform_2(%arg0: i32, %arg1: i32) -> (i32, i32) {
    %c0_i32 = arith.constant 0 : i32
    %c0_i32_0 = arith.constant 0 : i32
    %c0_i32_1 = arith.constant 0 : i32
    return %c0_i32, %c0_i32_0 : i32, i32
  }
  func.func @transform_3(%arg0: i32, %arg1: i32) -> (i32, i32) {
    %c0_i32 = arith.constant 0 : i32
    %c0_i32_0 = arith.constant 0 : i32
    %c0_i32_1 = arith.constant 0 : i32
    return %c0_i32, %c0_i32_0 : i32, i32
  }
  func.func @transform_4(%arg0: i32, %arg1: i32) -> (i32, i32) {
    %c0_i32 = arith.constant 0 : i32
    %c0_i32_0 = arith.constant 0 : i32
    %c0_i32_1 = arith.constant 0 : i32
    return %c0_i32, %c0_i32_0 : i32, i32
  }
  func.func @transform_5(%arg0: i32, %arg1: i32) -> (i32, i32) {
    %c0_i32 = arith.constant 0 : i32
    %c0_i32_0 = arith.constant 0 : i32
    %c0_i32_1 = arith.constant 0 : i32
    return %c0_i32, %c0_i32_0 : i32, i32
  }
  func.func @transform_6(%arg0: i32, %arg1: i32) -> (i32, i32, i32) {
    %c0_i32 = arith.constant 0 : i32
    %c0_i32_0 = arith.constant 0 : i32
    return %arg0, %c0_i32, %arg1 : i32, i32, i32
  }
}

</mosaic_0001>

<llo_original>
// kernel: tpu_custom_call.1
$region0: #{tpu_custom_call.1}
  #allocation0 [shape = 'u32[]', space=smem, size = 0x4, offset = 0x4, fixed_abs, tag = 'smem constant byte address 0x4 - core index']
  #allocation1 [shape = 'u32[144,128]{1,0:T(1,128)}', space=vmem, size = 0x12000, scoped, tag = 'internal scratch']
  %s0 = inlined_call_operand.hbm [shape: f32[2,8,256], index: 0, kind: input, shape index: {}]
  %s1 = inlined_call_operand.hbm [shape: f32[2,8,256], index: 1, kind: input, shape index: {}]
  %s2 = inlined_call_operand.vmem [shape: f32[8,8], index: 2, kind: input, shape index: {}]
  %s3 = inlined_call_operand.vmem [shape: f32[8,8], index: 3, kind: input, shape index: {}]
  %s4 = inlined_call_operand.vmem [shape: f32[8,1], index: 4, kind: input, shape index: {}]
  %s5 = inlined_call_operand.vmem [shape: f32[8,8], index: 5, kind: input, shape index: {}]
  %s6 = inlined_call_operand.hbm [shape: f32[2,4,256], index: 6, kind: output, shape index: {}]
  %s7 = sld [smem:[#allocation0]]
  $region65: #{tpu_custom_call.1} parent=0
    _
  %s9 = ssub.s32 1, %s7
  %s10 = scalar_select 0, %s9, %s7
  $region1: #{tpu_custom_call.1} parent=0
    #allocation2 [shape = 'u8[8192]{0}', space=vmem, size = 0x2000, scoped, tag = 'input window, operand 0']
    #allocation3 [shape = 's32[2]{0}', space=sflag, size = 0x8, scoped, tag = 'scoped memory for tpu_custom_call.1']
    #allocation4 [shape = 's32[2]{0}', space=sflag, size = 0x8, scoped, tag = 'scoped memory for tpu_custom_call.1']
    #allocation5 [shape = 'u8[8192]{0}', space=vmem, size = 0x2000, scoped, tag = 'input window, operand 1']
    #allocation6 [shape = 's32[2]{0}', space=sflag, size = 0x8, scoped, tag = 'scoped memory for tpu_custom_call.1']
    #allocation7 [shape = 'u8[4096]{0}', space=vmem, size = 0x1000, scoped, tag = 'output window, operand 0']
    %11 = vsyncpa [#allocation3], 0
    %s12 = scalar_lea.sflag [#allocation3], 1
    %13 = vsyncpa %s12, 0
    %14 = vsyncpa [#allocation6], 0
    %s15 = scalar_lea.sflag [#allocation6], 1
    %16 = vsyncpa %s15, 0
    %17 = vsyncpa [#allocation4], 0
    %s18 = scalar_lea.sflag [#allocation4], 1
    %19 = vsyncpa %s18, 0
    loop: start=0, step=1, limit=6
    $region2: #{tpu_custom_call.1} parent=1 // loop_pre_header
      _
    $region3: #{tpu_custom_call.1} parent=1 // loop_header
      %s21 = sphi 0, %s25
      %p22 = scmp.ge.s32.totalorder %s21, 6
      %s28 = sphi 0, %s40
      %s29 = sphi 0, %s36
      %s30 = sphi 0, %s28
      %s31 = sphi 0, %s29
      %s32 = sphi 0, %s30
      %s33 = sphi 0, %s31
      %s45 = sphi 0, %s47
      %s48 = sphi 0, %s45
      %s49 = sphi 0, %s48
      %s65 = sphi 0, %s49
      %s73 = sphi 0, %s75
      %s76 = sphi 0, %s73
      %s77 = sphi 0, %s76
      %s93 = sphi 0, %s77
      %s97 = sphi 0, %s97
      %s99 = sphi 0, %s97
      %s100 = sphi 0, %s99
      %s114 = sphi 0, %s100
      %s118 = sphi 0, %s118
      %s120 = sphi 0, %s118
      %s121 = sphi 0, %s120
      %s135 = sphi 0, %s121
      %s139 = sphi 0, %s139
      %s141 = sphi 0, %s139
      %s142 = sphi 0, %s141
      %s156 = sphi 0, %s142
      %s160 = sphi 0, %s160
      %s162 = sphi 0, %s160
      %s163 = sphi 0, %s162
      %s177 = sphi 0, %s163
      %s185 = sphi 0, %s187
      %s188 = sphi 0, %s185
      %s189 = sphi 0, %s188
      %s205 = sphi 0, %s189
    $region4: #{tpu_custom_call.1} parent=1 // loop_header_branch
      %24 = sbr.rel (%p22) target = $region8
    $region5: #{tpu_custom_call.1} parent=1 // loop_body
      %s26 = ssub.s32 %s21, 1
      %s27 = ssub.s32 %s21, 2
      %s34 = sadd.s32 1, %s29
      %p35 = scmp.ge.s32.totalorder %s34, 2
      %s36 = scalar_select %p35, 0, %s34
      %s37 = sadd.s32 1, %s28
      %s38 = scalar_select %p35, %s37, %s28
      %p39 = scmp.ge.s32.totalorder %s38, 2
      %s40 = scalar_select %p39, 0, %s38
      %s41 = ssub.s32 %s28, %s40
      %s42 = ssub.s32 %s29, %s36
      %s43 = sor.u32 %s41, %s42
      %p44 = scmp.eq.s32.totalorder %s43, 0
      %s46 = sadd.s32 %s45, 1
      %s47 = scalar_select %p44, %s45, %s46
      %p50 = pneg %p44
      %p51 = scmp.eq.s32.totalorder %s21, 3
      %p52 = por %p50, %p51
      %p53 = scmp.ne.s32.totalorder %s45, %s48
      %p54 = scmp.eq.s32.totalorder %s21, 0
      %p55 = por %p53, %p54
      %p56 = scmp.ne.s32.totalorder %s45, %s48
      %p57 = scmp.eq.s32.totalorder %s26, 3
      %p58 = por %p56, %p57
      %p59 = scmp.ne.s32.totalorder %s48, %s49
      %p60 = scmp.eq.s32.totalorder %s26, 0
      %p61 = por %p59, %p60
      %p62 = scmp.ne.s32.totalorder %s48, %s49
      %p63 = scmp.eq.s32.totalorder %s27, 3
      %p64 = por %p62, %p63
      %p66 = scmp.ne.s32.totalorder %s49, %s65
      %p67 = scmp.eq.s32.totalorder %s27, 0
      %p68 = por %p66, %p67
      %s69 = ssub.s32 %s28, %s40
      %s70 = ssub.s32 %s29, %s36
      %s71 = sor.u32 %s69, %s70
      %p72 = scmp.eq.s32.totalorder %s71, 0
      %s74 = sadd.s32 %s73, 1
      %s75 = scalar_select %p72, %s73, %s74
      %p78 = pneg %p72
      %p79 = scmp.eq.s32.totalorder %s21, 3
      %p80 = por %p78, %p79
      %p81 = scmp.ne.s32.totalorder %s73, %s76
      %p82 = scmp.eq.s32.totalorder %s21, 0
      %p83 = por %p81, %p82
      %p84 = scmp.ne.s32.totalorder %s73, %s76
      %p85 = scmp.eq.s32.totalorder %s26, 3
      %p86 = por %p84, %p85
      %p87 = scmp.ne.s32.totalorder %s76, %s77
      %p88 = scmp.eq.s32.totalorder %s26, 0
      %p89 = por %p87, %p88
      %p90 = scmp.ne.s32.totalorder %s76, %s77
      %p91 = scmp.eq.s32.totalorder %s27, 3
      %p92 = por %p90, %p91
      %p94 = scmp.ne.s32.totalorder %s77, %s93
      %p95 = scmp.eq.s32.totalorder %s27, 0
      %p96 = por %p94, %p95
      %s98 = sadd.s32 %s97, 1
      %p101 = scmp.eq.s32.totalorder %s21, 3
      %p102 = scmp.ne.s32.totalorder %s97, %s99
      %p103 = scmp.eq.s32.totalorder %s21, 0
      %p104 = por %p102, %p103
      %p105 = scmp.ne.s32.totalorder %s97, %s99
      %p106 = scmp.eq.s32.totalorder %s26, 3
      %p107 = por %p105, %p106
      %p108 = scmp.ne.s32.totalorder %s99, %s100
      %p109 = scmp.eq.s32.totalorder %s26, 0
      %p110 = por %p108, %p109
      %p111 = scmp.ne.s32.totalorder %s99, %s100
      %p112 = scmp.eq.s32.totalorder %s27, 3
      %p113 = por %p111, %p112
      %p115 = scmp.ne.s32.totalorder %s100, %s114
      %p116 = scmp.eq.s32.totalorder %s27, 0
      %p117 = por %p115, %p116
      %s119 = sadd.s32 %s118, 1
      %p122 = scmp.eq.s32.totalorder %s21, 3
      %p123 = scmp.ne.s32.totalorder %s118, %s120
      %p124 = scmp.eq.s32.totalorder %s21, 0
      %p125 = por %p123, %p124
      %p126 = scmp.ne.s32.totalorder %s118, %s120
      %p127 = scmp.eq.s32.totalorder %s26, 3
      %p128 = por %p126, %p127
      %p129 = scmp.ne.s32.totalorder %s120, %s121
      %p130 = scmp.eq.s32.totalorder %s26, 0
      %p131 = por %p129, %p130
      %p132 = scmp.ne.s32.totalorder %s120, %s121
      %p133 = scmp.eq.s32.totalorder %s27, 3
      %p134 = por %p132, %p133
      %p136 = scmp.ne.s32.totalorder %s121, %s135
      %p137 = scmp.eq.s32.totalorder %s27, 0
      %p138 = por %p136, %p137
      %s140 = sadd.s32 %s139, 1
      %p143 = scmp.eq.s32.totalorder %s21, 3
      %p144 = scmp.ne.s32.totalorder %s139, %s141
      %p145 = scmp.eq.s32.totalorder %s21, 0
      %p146 = por %p144, %p145
      %p147 = scmp.ne.s32.totalorder %s139, %s141
      %p148 = scmp.eq.s32.totalorder %s26, 3
      %p149 = por %p147, %p148
      %p150 = scmp.ne.s32.totalorder %s141, %s142
      %p151 = scmp.eq.s32.totalorder %s26, 0
      %p152 = por %p150, %p151
      %p153 = scmp.ne.s32.totalorder %s141, %s142
      %p154 = scmp.eq.s32.totalorder %s27, 3
      %p155 = por %p153, %p154
      %p157 = scmp.ne.s32.totalorder %s142, %s156
      %p158 = scmp.eq.s32.totalorder %s27, 0
      %p159 = por %p157, %p158
      %s161 = sadd.s32 %s160, 1
      %p164 = scmp.eq.s32.totalorder %s21, 3
      %p165 = scmp.ne.s32.totalorder %s160, %s162
      %p166 = scmp.eq.s32.totalorder %s21, 0
      %p167 = por %p165, %p166
      %p168 = scmp.ne.s32.totalorder %s160, %s162
      %p169 = scmp.eq.s32.totalorder %s26, 3
      %p170 = por %p168, %p169
      %p171 = scmp.ne.s32.totalorder %s162, %s163
      %p172 = scmp.eq.s32.totalorder %s26, 0
      %p173 = por %p171, %p172
      %p174 = scmp.ne.s32.totalorder %s162, %s163
      %p175 = scmp.eq.s32.totalorder %s27, 3
      %p176 = por %p174, %p175
      %p178 = scmp.ne.s32.totalorder %s163, %s177
      %p179 = scmp.eq.s32.totalorder %s27, 0
      %p180 = por %p178, %p179
      %s181 = ssub.s32 %s28, %s40
      %s182 = ssub.s32 %s29, %s36
      %s183 = sor.u32 %s181, %s182
      %p184 = scmp.eq.s32.totalorder %s183, 0
      %s186 = sadd.s32 %s185, 1
      %s187 = scalar_select %p184, %s185, %s186
      %p190 = pneg %p184
      %p191 = scmp.eq.s32.totalorder %s21, 3
      %p192 = por %p190, %p191
      %p193 = scmp.ne.s32.totalorder %s185, %s188
      %p194 = scmp.eq.s32.totalorder %s21, 0
      %p195 = por %p193, %p194
      %p196 = scmp.ne.s32.totalorder %s185, %s188
      %p197 = scmp.eq.s32.totalorder %s26, 3
      %p198 = por %p196, %p197
      %p199 = scmp.ne.s32.totalorder %s188, %s189
      %p200 = scmp.eq.s32.totalorder %s26, 0
      %p201 = por %p199, %p200
      %p202 = scmp.ne.s32.totalorder %s188, %s189
      %p203 = scmp.eq.s32.totalorder %s27, 3
      %p204 = por %p202, %p203
      %p206 = scmp.ne.s32.totalorder %s189, %s205
      %p207 = scmp.eq.s32.totalorder %s27, 0
      %p208 = por %p206, %p207
      %p209 = scmp.le.s32.totalorder 1, %s21
      %p210 = scmp.lt.s32.totalorder %s21, 5
      %p211 = pnand %p209, %p210
      %p212 = pneg %p211
      // Predicated region
      $region9: #{tpu_custom_call.1} parent=5 // pred_check
        _
      $region10: #{tpu_custom_call.1} parent=5 // pred_check_branch
        %214 = sbr.rel (%p211) target = $region12
      $region11: #{tpu_custom_call.1} parent=5 // pred_region
        %s215 = ssub.s32 %s21, 1
        // Predicated region
        $region13: #{tpu_custom_call.1} parent=11 // pred_check
          %p216 = pneg %p110
        $region14: #{tpu_custom_call.1} parent=11 // pred_check_branch
          %218 = sbr.rel (%p216) target = $region16
        $region15: #{tpu_custom_call.1} parent=11 // pred_region
          _
        $region16: #{tpu_custom_call.1} parent=11 // pred_fallthru
          _
        // Predicated region
        $region17: #{tpu_custom_call.1} parent=11 // pred_check
          %p219 = pneg %p131
        $region18: #{tpu_custom_call.1} parent=11 // pred_check_branch
          %221 = sbr.rel (%p219) target = $region20
        $region19: #{tpu_custom_call.1} parent=11 // pred_region
          _
        $region20: #{tpu_custom_call.1} parent=11 // pred_fallthru
          _
        // Predicated region
        $region21: #{tpu_custom_call.1} parent=11 // pred_check
          %p222 = pneg %p152
        $region22: #{tpu_custom_call.1} parent=11 // pred_check_branch
          %224 = sbr.rel (%p222) target = $region24
        $region23: #{tpu_custom_call.1} parent=11 // pred_region
          _
        $region24: #{tpu_custom_call.1} parent=11 // pred_fallthru
          _
        // Predicated region
        $region25: #{tpu_custom_call.1} parent=11 // pred_check
          %p225 = pneg %p173
        $region26: #{tpu_custom_call.1} parent=11 // pred_check_branch
          %227 = sbr.rel (%p225) target = $region28
        $region27: #{tpu_custom_call.1} parent=11 // pred_region
          _
        $region28: #{tpu_custom_call.1} parent=11 // pred_fallthru
          _
      $region12: #{tpu_custom_call.1} parent=5 // pred_fallthru
        _
      %p228 = scmp.lt.s32.totalorder %s21, 4
      // Predicated region
      $region29: #{tpu_custom_call.1} parent=5 // pred_check
        %p229 = pneg %p228
      $region30: #{tpu_custom_call.1} parent=5 // pred_check_branch
        %231 = sbr.rel (%p229) target = $region32
      $region31: #{tpu_custom_call.1} parent=5 // pred_region
        // Predicated region
        $region33: #{tpu_custom_call.1} parent=31 // pred_check
          %p232 = pneg %p55
        $region34: #{tpu_custom_call.1} parent=31 // pred_check_branch
          %234 = sbr.rel (%p232) target = $region36
        $region35: #{tpu_custom_call.1} parent=31 // pred_region
          %s235 = sand.u32 %s45, 1
          %s236 = scalar_lea.sflag [#allocation3], %s235
          %s237 = sand.u32 %s45, 1
          %s238 = smul.addr %s237, 8
          %s239 = scalar_lea.vmem [#allocation2], %s238
          %s241 = ssub.s32 128, 128
          %242 = vsyncadd %s236, %s241
          %s243 = smul.addr %s28, 2
          %s244 = sadd.s32 %s29, %s243
          %s245 = smul.addr %s244, 128
          %s246 = scalar_lea.hbm %s0, %s245
          %s248 = sshll.u32 %s239, 4
          %s249 = int_to_ptr.vmem [resolvable:$true] %s248
          %251 = dma.hbm_to_vmem [thread:$0]  %s246, 128, %s249, %s236
        $region36: #{tpu_custom_call.1} parent=31 // pred_fallthru
          _
        // Predicated region
        $region37: #{tpu_custom_call.1} parent=31 // pred_check
          %p252 = pneg %p83
        $region38: #{tpu_custom_call.1} parent=31 // pred_check_branch
          %254 = sbr.rel (%p252) target = $region40
        $region39: #{tpu_custom_call.1} parent=31 // pred_region
          %s255 = sand.u32 %s73, 1
          %s256 = scalar_lea.sflag [#allocation6], %s255
          %s257 = sand.u32 %s73, 1
          %s258 = smul.addr %s257, 8
          %s259 = scalar_lea.vmem [#allocation5], %s258
          %s261 = ssub.s32 128, 128
          %262 = vsyncadd %s256, %s261
          %s263 = smul.addr %s28, 2
          %s264 = sadd.s32 %s29, %s263
          %s265 = smul.addr %s264, 128
          %s266 = scalar_lea.hbm %s1, %s265
          %s268 = sshll.u32 %s259, 4
          %s269 = int_to_ptr.vmem [resolvable:$true] %s268
          %271 = dma.hbm_to_vmem [thread:$0]  %s266, 128, %s269, %s256
        $region40: #{tpu_custom_call.1} parent=31 // pred_fallthru
          _
      $region32: #{tpu_custom_call.1} parent=5 // pred_fallthru
        _
      %p272 = scmp.le.s32.totalorder 1, %s21
      %p273 = scmp.lt.s32.totalorder %s21, 5
      %p274 = pnand %p272, %p273
      %p275 = pneg %p274
      // Predicated region
      $region41: #{tpu_custom_call.1} parent=5 // pred_check
        _
      $region42: #{tpu_custom_call.1} parent=5 // pred_check_branch
        %277 = sbr.rel (%p274) target = $region44
      $region43: #{tpu_custom_call.1} parent=5 // pred_region
        %s278 = ssub.s32 %s21, 1
        %s279 = sand.u32 %s48, 1
        %s280 = scalar_lea.sflag [#allocation3], %s279
        %s281 = sand.u32 %s48, 1
        %s282 = smul.addr %s281, 8
        %s283 = scalar_lea.vmem [#allocation2], %s282
        // Predicated region
        $region45: #{tpu_custom_call.1} parent=43 // pred_check
          %p284 = pneg %p61
        $region46: #{tpu_custom_call.1} parent=43 // pred_check_branch
          %286 = sbr.rel (%p284) target = $region48
        $region47: #{tpu_custom_call.1} parent=43 // pred_region
          %287 = dma.done %s280, 128
        $region48: #{tpu_custom_call.1} parent=43 // pred_fallthru
          _
        %s288 = sand.u32 %s76, 1
        %s289 = scalar_lea.sflag [#allocation6], %s288
        %s290 = sand.u32 %s76, 1
        %s291 = smul.addr %s290, 8
        %s292 = scalar_lea.vmem [#allocation5], %s291
        // Predicated region
        $region49: #{tpu_custom_call.1} parent=43 // pred_check
          %p293 = pneg %p89
        $region50: #{tpu_custom_call.1} parent=43 // pred_check_branch
          %295 = sbr.rel (%p293) target = $region52
        $region51: #{tpu_custom_call.1} parent=43 // pred_region
          %296 = dma.done %s289, 128
        $region52: #{tpu_custom_call.1} parent=43 // pred_fallthru
          _
        %s297 = sand.u32 %s48, 1
        %s298 = scalar_lea.sflag [#allocation3], %s297
        %s299 = sand.u32 %s48, 1
        %s300 = smul.addr %s299, 8
        %s301 = scalar_lea.vmem [#allocation2], %s300
        %p302 = pneg %p61
        %p303 = pneg %p58
        %s304 = sand.u32 %s76, 1
        %s305 = scalar_lea.sflag [#allocation6], %s304
        %s306 = sand.u32 %s76, 1
        %s307 = smul.addr %s306, 8
        %s308 = scalar_lea.vmem [#allocation5], %s307
        %p309 = pneg %p89
        %p310 = pneg %p86
        %p311 = pneg %p110
        %p312 = pneg %p107
        %p313 = pneg %p131
        %p314 = pneg %p128
        %p315 = pneg %p152
        %p316 = pneg %p149
        %p317 = pneg %p173
        %p318 = pneg %p170
        %p319 = pneg %p201
        %p320 = pneg %p198
        %s321 = sand.u32 %s188, 1
        %s322 = scalar_lea.sflag [#allocation4], %s321
        %s323 = sand.u32 %s188, 1
        %s324 = smul.addr %s323, 4
        %s325 = scalar_lea.vmem [#allocation7], %s324
        %v326 = vld [vmem:[%s283] sm:$0xff]
        %v327 = vld [vmem:[%s292] sm:$0xff]
        %v328 = vld [vmem:[%s2] sm:$0xff]
        %v329 = vld [vmem:[%s3] sm:$0xff]
        %vm330 = vcmask 64512
        %v332 = vsel %vm330, %v329, 0
        %334 = vmatprep.subr.mxu0 0.0
        %335 = vmatpush1.msra.mxu0 %v327
        %336 = vmatprep.subr.mxu0 0.0
        %337 = vmatpush1.msra.mxu0 0.0
        %338 = vmatprep.subr.mxu0 0.0
        %339 = vmatpush1.msra.mxu0 0.0
        %340 = vmatprep.subr.mxu0 0.0
        %341 = vmatpush1.msra.mxu0 0.0
        %342 = vmatprep.subr.mxu0 0.0
        %343 = vmatpush1.msra.mxu0 0.0
        %344 = vmatprep.subr.mxu0 0.0
        %345 = vmatpush1.msra.mxu0 0.0
        %346 = vmatprep.subr.mxu0 0.0
        %347 = vmatpush1.msra.mxu0 0.0
        %348 = vmatprep.subr.mxu0 0.0
        %349 = vmatpush1.msra.mxu0 0.0
        %350 = vmatprep.subr.mxu0 0.0
        %351 = vmatpush1.msra.mxu0 0.0
        %352 = vmatprep.subr.mxu0 0.0
        %353 = vmatpush1.msra.mxu0 0.0
        %354 = vmatprep.subr.mxu0 0.0
        %355 = vmatpush1.msra.mxu0 0.0
        %356 = vmatprep.subr.mxu0 0.0
        %357 = vmatpush1.msra.mxu0 0.0
        %358 = vmatprep.subr.mxu0 0.0
        %359 = vmatpush1.msra.mxu0 0.0
        %360 = vmatprep.subr.mxu0 0.0
        %361 = vmatpush1.msra.mxu0 0.0
        %362 = vmatprep.subr.mxu0 0.0
        %363 = vmatpush1.msra.mxu0 0.0
        %364 = vmatprep.subr.mxu0 0.0
        %365 = vmatpush1.msra.mxu0 0.0
        %366 = vmatprep.subr.mxu0 0.0
        %367 = vmatpush1.msra.mxu0 0.0
        %368 = vmatprep.subr.mxu0 0.0
        %369 = vmatpush1.msra.mxu0 0.0
        %370 = vmatprep.subr.mxu0 0.0
        %371 = vmatpush1.msra.mxu0 0.0
        %372 = vmatprep.subr.mxu0 0.0
        %373 = vmatpush1.msra.mxu0 0.0
        %374 = vmatprep.subr.mxu0 0.0
        %375 = vmatpush1.msra.mxu0 0.0
        %376 = vmatprep.subr.mxu0 0.0
        %377 = vmatpush1.msra.mxu0 0.0
        %378 = vmatprep.subr.mxu0 0.0
        %379 = vmatpush1.msra.mxu0 0.0
        %380 = vmatprep.subr.mxu0 0.0
        %381 = vmatpush1.msra.mxu0 0.0
        %382 = vmatprep.subr.mxu0 0.0
        %383 = vmatpush1.msra.mxu0 0.0
        %384 = vmatprep.subr.mxu0 0.0
        %385 = vmatpush1.msra.mxu0 0.0
        %386 = vmatprep.subr.mxu0 0.0
        %387 = vmatpush1.msra.mxu0 0.0
        %388 = vmatprep.subr.mxu0 0.0
        %389 = vmatpush1.msra.mxu0 0.0
        %390 = vmatprep.subr.mxu0 0.0
        %391 = vmatpush1.msra.mxu0 0.0
        %392 = vmatprep.subr.mxu0 0.0
        %393 = vmatpush1.msra.mxu0 0.0
        %394 = vmatprep.subr.mxu0 0.0
        %395 = vmatpush1.msra.mxu0 0.0
        %396 = vmatprep.subr.mxu0 0.0
        %397 = vmatpush1.msra.mxu0 0.0
        %398 = vmatprep.mubr.f32.mxu0 0.0
        %399 = vmatmul.mubr.f32.gmra.mrb[0].mxu0 %v332
        %v400 = vpop.f32.mrb[0].mxu0
        %v401 = vadd.f32 0.0, %v400
        %v402 = vpop.f32.mrb[0].mxu0
        %403 = vdwg.mxu0
        %v405 = vsel %vm330, %v328, 0
        %407 = vmatprep.subr.mxu0 0.0
        %408 = vmatpush1.msra.mxu0 %v326
        %409 = vmatprep.subr.mxu0 0.0
        %410 = vmatpush1.msra.mxu0 0.0
        %411 = vmatprep.subr.mxu0 0.0
        %412 = vmatpush1.msra.mxu0 0.0
        %413 = vmatprep.subr.mxu0 0.0
        %414 = vmatpush1.msra.mxu0 0.0
        %415 = vmatprep.subr.mxu0 0.0
        %416 = vmatpush1.msra.mxu0 0.0
        %417 = vmatprep.subr.mxu0 0.0
        %418 = vmatpush1.msra.mxu0 0.0
        %419 = vmatprep.subr.mxu0 0.0
        %420 = vmatpush1.msra.mxu0 0.0
        %421 = vmatprep.subr.mxu0 0.0
        %422 = vmatpush1.msra.mxu0 0.0
        %423 = vmatprep.subr.mxu0 0.0
        %424 = vmatpush1.msra.mxu0 0.0
        %425 = vmatprep.subr.mxu0 0.0
        %426 = vmatpush1.msra.mxu0 0.0
        %427 = vmatprep.subr.mxu0 0.0
        %428 = vmatpush1.msra.mxu0 0.0
        %429 = vmatprep.subr.mxu0 0.0
        %430 = vmatpush1.msra.mxu0 0.0
        %431 = vmatprep.subr.mxu0 0.0
        %432 = vmatpush1.msra.mxu0 0.0
        %433 = vmatprep.subr.mxu0 0.0
        %434 = vmatpush1.msra.mxu0 0.0
        %435 = vmatprep.subr.mxu0 0.0
        %436 = vmatpush1.msra.mxu0 0.0
        %437 = vmatprep.subr.mxu0 0.0
        %438 = vmatpush1.msra.mxu0 0.0
        %439 = vmatprep.subr.mxu0 0.0
        %440 = vmatpush1.msra.mxu0 0.0
        %441 = vmatprep.subr.mxu0 0.0
        %442 = vmatpush1.msra.mxu0 0.0
        %443 = vmatprep.subr.mxu0 0.0
        %444 = vmatpush1.msra.mxu0 0.0
        %445 = vmatprep.subr.mxu0 0.0
        %446 = vmatpush1.msra.mxu0 0.0
        %447 = vmatprep.subr.mxu0 0.0
        %448 = vmatpush1.msra.mxu0 0.0
        %449 = vmatprep.subr.mxu0 0.0
        %450 = vmatpush1.msra.mxu0 0.0
        %451 = vmatprep.subr.mxu0 0.0
        %452 = vmatpush1.msra.mxu0 0.0
        %453 = vmatprep.subr.mxu0 0.0
        %454 = vmatpush1.msra.mxu0 0.0
        %455 = vmatprep.subr.mxu0 0.0
        %456 = vmatpush1.msra.mxu0 0.0
        %457 = vmatprep.subr.mxu0 0.0
        %458 = vmatpush1.msra.mxu0 0.0
        %459 = vmatprep.subr.mxu0 0.0
        %460 = vmatpush1.msra.mxu0 0.0
        %461 = vmatprep.subr.mxu0 0.0
        %462 = vmatpush1.msra.mxu0 0.0
        %463 = vmatprep.subr.mxu0 0.0
        %464 = vmatpush1.msra.mxu0 0.0
        %465 = vmatprep.subr.mxu0 0.0
        %466 = vmatpush1.msra.mxu0 0.0
        %467 = vmatprep.subr.mxu0 0.0
        %468 = vmatpush1.msra.mxu0 0.0
        %469 = vmatprep.subr.mxu0 0.0
        %470 = vmatpush1.msra.mxu0 0.0
        %471 = vmatprep.mubr.f32.mxu0 0.0
        %472 = vmatmul.mubr.f32.gmra.mrb[0].mxu0 %v405
        %v473 = vpop.f32.mrb[0].mxu0
        %v474 = vadd.f32 %v401, %v473
        %v475 = vpop.f32.mrb[0].mxu0
        %476 = vdwg.mxu0
        %v477 = vld [vmem:[%s4] sm:$0xff]
        %479 = vset.pattern.permute.xlu0 0
        %480 = vperm.xlu0 %479, %v477
        %v481 = vpop.permute.xlu0 %480
        %v483 = vadd.f32 %v474, %v481
        %v484 = vmax.f32 %v483, 0.0
        %v485 = vld [vmem:[%s5] sm:$0xff]
        %v487 = vsel %vm330, %v485, 0
        %489 = vmatprep.subr.mxu0 0.0
        %490 = vmatpush1.msra.mxu0 %v484
        %491 = vmatprep.subr.mxu0 0.0
        %492 = vmatpush1.msra.mxu0 0.0
        %493 = vmatprep.subr.mxu0 0.0
        %494 = vmatpush1.msra.mxu0 0.0
        %495 = vmatprep.subr.mxu0 0.0
        %496 = vmatpush1.msra.mxu0 0.0
        %497 = vmatprep.subr.mxu0 0.0
        %498 = vmatpush1.msra.mxu0 0.0
        %499 = vmatprep.subr.mxu0 0.0
        %500 = vmatpush1.msra.mxu0 0.0
        %501 = vmatprep.subr.mxu0 0.0
        %502 = vmatpush1.msra.mxu0 0.0
        %503 = vmatprep.subr.mxu0 0.0
        %504 = vmatpush1.msra.mxu0 0.0
        %505 = vmatprep.subr.mxu0 0.0
        %506 = vmatpush1.msra.mxu0 0.0
        %507 = vmatprep.subr.mxu0 0.0
        %508 = vmatpush1.msra.mxu0 0.0
        %509 = vmatprep.subr.mxu0 0.0
        %510 = vmatpush1.msra.mxu0 0.0
        %511 = vmatprep.subr.mxu0 0.0
        %512 = vmatpush1.msra.mxu0 0.0
        %513 = vmatprep.subr.mxu0 0.0
        %514 = vmatpush1.msra.mxu0 0.0
        %515 = vmatprep.subr.mxu0 0.0
        %516 = vmatpush1.msra.mxu0 0.0
        %517 = vmatprep.subr.mxu0 0.0
        %518 = vmatpush1.msra.mxu0 0.0
        %519 = vmatprep.subr.mxu0 0.0
        %520 = vmatpush1.msra.mxu0 0.0
        %521 = vmatprep.subr.mxu0 0.0
        %522 = vmatpush1.msra.mxu0 0.0
        %523 = vmatprep.subr.mxu0 0.0
        %524 = vmatpush1.msra.mxu0 0.0
        %525 = vmatprep.subr.mxu0 0.0
        %526 = vmatpush1.msra.mxu0 0.0
        %527 = vmatprep.subr.mxu0 0.0
        %528 = vmatpush1.msra.mxu0 0.0
        %529 = vmatprep.subr.mxu0 0.0
        %530 = vmatpush1.msra.mxu0 0.0
        %531 = vmatprep.subr.mxu0 0.0
        %532 = vmatpush1.msra.mxu0 0.0
        %533 = vmatprep.subr.mxu0 0.0
        %534 = vmatpush1.msra.mxu0 0.0
        %535 = vmatprep.subr.mxu0 0.0
        %536 = vmatpush1.msra.mxu0 0.0
        %537 = vmatprep.subr.mxu0 0.0
        %538 = vmatpush1.msra.mxu0 0.0
        %539 = vmatprep.subr.mxu0 0.0
        %540 = vmatpush1.msra.mxu0 0.0
        %541 = vmatprep.subr.mxu0 0.0
        %542 = vmatpush1.msra.mxu0 0.0
        %543 = vmatprep.subr.mxu0 0.0
        %544 = vmatpush1.msra.mxu0 0.0
        %545 = vmatprep.subr.mxu0 0.0
        %546 = vmatpush1.msra.mxu0 0.0
        %547 = vmatprep.subr.mxu0 0.0
        %548 = vmatpush1.msra.mxu0 0.0
        %549 = vmatprep.subr.mxu0 0.0
        %550 = vmatpush1.msra.mxu0 0.0
        %551 = vmatprep.subr.mxu0 0.0
        %552 = vmatpush1.msra.mxu0 0.0
        %553 = vmatprep.mubr.f32.mxu0 0.0
        %554 = vmatmul.mubr.f32.gmra.mrb[0].mxu0 %v487
        %v555 = vpop.f32.mrb[0].mxu0
        %v556 = vadd.f32 0.0, %v555
        %v557 = vpop.f32.mrb[0].mxu0
        %558 = vdwg.mxu0
        %v559 = vld [vmem:[%s5 + $0x1] sm:$0x1]
        %561 = vset.pattern.permute.xlu0 0
        %562 = vperm.xlu0 %561, %v559
        %v563 = vpop.permute.xlu0 %562
        %v565 = vadd.f32 %v556, %v563
        %v566 = vxor.u32 %v565, 2147483648
        %v567 = vmul.f32 %v566, 1.442695
        %v568 = vpow.pop %v567
        %v569 = vadd.f32 %v568, 1.0
        %v570 = vrcp.pop %v569
        %v571 = vmul.f32 1.0, %v570
        %v572 = vlaneseq
        %v573 = vshrl.u32 %v572, 7
        %v574 = vsub.s32 0, %v573
        %v575 = vrot.slane %v571, %v574
        %v576 = vmul.f32 %v326, %v575
        %577 = vst [vmem:[%s325] sm:$0xf] %v576
        %s578 = sand.u32 %s188, 1
        %s579 = scalar_lea.sflag [#allocation4], %s578
        %s580 = sand.u32 %s188, 1
        %s581 = smul.addr %s580, 4
        %s582 = scalar_lea.vmem [#allocation7], %s581
        // Predicated region
        $region53: #{tpu_custom_call.1} parent=43 // pred_check
          %p583 = pneg %p198
        $region54: #{tpu_custom_call.1} parent=43 // pred_check_branch
          %585 = sbr.rel (%p583) target = $region56
        $region55: #{tpu_custom_call.1} parent=43 // pred_region
          %s587 = ssub.s32 64, 64
          %588 = vsyncadd %s579, %s587
          %s589 = smul.addr %s30, 2
          %s590 = sadd.s32 %s31, %s589
          %s591 = smul.addr %s590, 64
          %s592 = scalar_lea.hbm %s6, %s591
          %s594 = sshll.u32 %s582, 4
          %s595 = int_to_ptr.vmem [resolvable:$true] %s594
          %597 = dma.vmem_to_hbm [thread:$0]  %s595, 64, %s592, %s579
        $region56: #{tpu_custom_call.1} parent=43 // pred_fallthru
          _
      $region44: #{tpu_custom_call.1} parent=5 // pred_fallthru
        _
      %p598 = scmp.le.s32.totalorder 2, %s21
      // Predicated region
      $region57: #{tpu_custom_call.1} parent=5 // pred_check
        %p599 = pneg %p598
      $region58: #{tpu_custom_call.1} parent=5 // pred_check_branch
        %601 = sbr.rel (%p599) target = $region60
      $region59: #{tpu_custom_call.1} parent=5 // pred_region
        %s602 = ssub.s32 %s21, 2
        // Predicated region
        $region61: #{tpu_custom_call.1} parent=59 // pred_check
          %p603 = pneg %p204
        $region62: #{tpu_custom_call.1} parent=59 // pred_check_branch
          %605 = sbr.rel (%p603) target = $region64
        $region63: #{tpu_custom_call.1} parent=59 // pred_region
          %s606 = sand.u32 %s189, 1
          %s607 = scalar_lea.sflag [#allocation4], %s606
          %s608 = sand.u32 %s189, 1
          %s609 = smul.addr %s608, 4
          %s610 = scalar_lea.vmem [#allocation7], %s609
          %611 = dma.done %s607, 64
        $region64: #{tpu_custom_call.1} parent=59 // pred_fallthru
          _
      $region60: #{tpu_custom_call.1} parent=5 // pred_fallthru
        _
    $region6: #{tpu_custom_call.1} parent=1 // loop_footer
      %s25 = sadd.s32 1, %s21
    $region7: #{tpu_custom_call.1} parent=1 // loop_footer_branch
      %20 = sbr.rel target = $region3
    $region8: #{tpu_custom_call.1} parent=1 // loop_exit
      _
    %612 = vsyncpa [#allocation3], 1
    %s613 = scalar_lea.sflag [#allocation3], 1
    %614 = vsyncpa %s613, 1
    %615 = vsyncpa [#allocation6], 1
    %s616 = scalar_lea.sflag [#allocation6], 1
    %617 = vsyncpa %s616, 1
    %618 = vsyncpa [#allocation4], 1
    %s619 = scalar_lea.sflag [#allocation4], 1
    %620 = vsyncpa %s619, 1

</llo_original>
